<compile_context>
chip_gen: v7x
topology: tpu7x:2x2x1
jax: 0.10.0
libtpu: 0.0.40
codegen_flags: <defaults>
</compile_context>

<pallas_src>
import functools

import jax
import jax.numpy as jnp
from jax import lax
from jax.experimental import pallas as pl
from jax.experimental.pallas import tpu as pltpu


# -----------------------------------------------------------------------------
# Shared conv body: one fused-K MXU matmul per HW band.
# -----------------------------------------------------------------------------

def _conv_band(x_ref, w_ref, t, *, stride, band_rows, w_out):
    """Raw 3x3-conv contribution of HW band `t` as a single K=9*Cin matmul.

    x_ref : [1, s, s, Hq, Wq, Cin]  phase-split padded activation (resident),
            x_ref[0, jh, jw, q, p, c] == x_pad[q*s + jh, p*s + jw, c]
    w_ref : [Cout, 9*Cin]           weight, K ordered (kh, kw, cin)
    returns f32 [Cout, band_rows * w_out]
    """
    s = stride
    cin = x_ref.shape[5]
    tile = band_rows * w_out
    row0 = t * band_rows

    taps = []
    for kh in range(3):
        jh, ph = kh % s, kh // s
        for kw in range(3):
            jw, pw = kw % s, kw // s
            xs = x_ref[0, jh, jw, pl.ds(row0 + ph, band_rows),
                       pl.ds(pw, w_out), :]               # [TR, W_out, Cin]
            taps.append(xs.reshape(tile, cin))
    xcat = jnp.concatenate(taps, axis=1)                   # [tile, 9*Cin]

    # Single MXU contraction with K = 9*Cin (perf review: un-starve the MXU,
    # drop the 8 per-tap full-tile f32 adds).
    return lax.dot_general(w_ref[...], xcat,
                           (((1,), (1,)), ((), ())),
                           preferred_element_type=jnp.float32)   # [Cout, tile]


# -----------------------------------------------------------------------------
# Fused kernel: conv -> resident raw output -> InstanceNorm + ReLU in place.
# -----------------------------------------------------------------------------

def _fused_conv_in_relu_kernel(x_ref, w_ref, o_ref, sum_ref, *,
                               stride, band_rows, w_out, n_bands, hw_total,
                               eps):
    # o_ref   : [1, Cout, HW] lane-dense, resident across the band axis
    # sum_ref : [Cout, 1] f32 running per-channel spatial sum
    t = pl.program_id(1)
    tile = band_rows * w_out

    @pl.when(t == 0)
    def _init():
        sum_ref[...] = jnp.zeros_like(sum_ref)

    acc = _conv_band(x_ref, w_ref, t, stride=stride, band_rows=band_rows,
                     w_out=w_out)                          # [Cout, tile] f32
    sum_ref[...] += jnp.sum(acc, axis=1, keepdims=True)

    # NOTE: the conv bias is dropped on purpose: InstanceNorm2d(affine=False)
    # subtracts the per-channel spatial mean, which cancels a per-channel bias
    # exactly (variance is shift-invariant).
    if n_bands == 1:
        o_ref[0] = acc.astype(o_ref.dtype)
    else:
        off = pl.multiple_of(t * tile, 128)                # tile % 128 == 0 here
        o_ref[0, :, pl.ds(off, tile)] = acc.astype(o_ref.dtype)

    @pl.when(t == n_bands - 1)
    def _finalize():
        inv_n = 1.0 / float(hw_total)
        mean = sum_ref[...] * inv_n                        # [Cout, 1]
        yc = o_ref[0].astype(jnp.float32) - mean           # [Cout, HW]
        # Exact two-pass variance on the resident block (review: avoids the
        # E[x^2] - E[x]^2 cancellation issue of the one-pass form).
        var = jnp.sum(yc * yc, axis=1, keepdims=True) * inv_n
        o_ref[0] = jnp.maximum(yc * lax.rsqrt(var + eps), 0.0).astype(o_ref.dtype)


# -----------------------------------------------------------------------------
# Fallback path (large Cout*HW): conv + streamed stats, then norm + ReLU.
# -----------------------------------------------------------------------------

def _conv_stats_kernel(x_ref, w_ref, conv_ref, stats_ref, sum_ref, ssq_ref, *,
                       stride, band_rows, w_out, n_bands):
    t = pl.program_id(1)

    @pl.when(t == 0)
    def _init():
        sum_ref[...] = jnp.zeros_like(sum_ref)
        ssq_ref[...] = jnp.zeros_like(ssq_ref)

    acc = _conv_band(x_ref, w_ref, t, stride=stride, band_rows=band_rows,
                     w_out=w_out)                          # [Cout, tile] f32
    sum_ref[...] += jnp.sum(acc, axis=1, keepdims=True)
    ssq_ref[...] += jnp.sum(acc * acc, axis=1, keepdims=True)
    conv_ref[0] = acc.astype(conv_ref.dtype)               # lane-dense store

    @pl.when(t == n_bands - 1)
    def _emit_stats():
        # TODO(synk): lay stats out with Cout on lanes (or SMEM) to avoid the
        # width-2 masked store; cost is negligible here.
        stats_ref[0, :, 0:1] = sum_ref[...]
        stats_ref[0, :, 1:2] = ssq_ref[...]


def _norm_relu_kernel(conv_ref, stats_ref, o_ref, *, hw_total, eps):
    inv_n = 1.0 / float(hw_total)
    mean = stats_ref[0, :, 0:1] * inv_n                    # [Cout, 1]
    var = jnp.maximum(stats_ref[0, :, 1:2] * inv_n - mean * mean, 0.0)
    y = (conv_ref[0].astype(jnp.float32) - mean) * lax.rsqrt(var + eps)
    o_ref[0] = jnp.maximum(y, 0.0).astype(o_ref.dtype)


# -----------------------------------------------------------------------------
# Wrapper helpers.
# -----------------------------------------------------------------------------

def _pick_band_rows(h_out, w_out, max_positions):
    """Largest divisor TR of h_out with TR*w_out a multiple of 128 and within
    the band budget.  If none exists, fall back to a single full-extent band
    (always layout-legal); we never silently exceed the requested budget."""
    best = None
    for tr in range(1, h_out + 1):
        if h_out % tr:
            continue
        tile = tr * w_out
        if tile % 128 == 0 and tile <= max_positions:
            best = tr
    return best if best is not None else h_out


def _pick_norm_chunk(hw, max_chunk=8192):
    """Largest 128-aligned divisor of hw not exceeding max_chunk, else hw."""
    cand = None
    c = 128
    while c <= min(hw, max_chunk):
        if hw % c == 0:
            cand = c
        c += 128
    return cand if cand is not None else hw


def _vmem_limit(est_bytes):
    # Size the scoped-VMEM limit from the actual footprint (perf review: bigger
    # bands on v5e/v6e).  TODO(synk): cap lower / stream the activation on v7x.
    return int(min(96 * 1024 * 1024, max(32 * 1024 * 1024, int(est_bytes * 1.4))))


# -----------------------------------------------------------------------------
# Public entry point.
# -----------------------------------------------------------------------------

@functools.partial(jax.jit,
                   static_argnames=("stride", "max_band_positions",
                                    "compute_dtype", "fuse_vmem_budget"))
def g_downsampling_block(x_nchw, weight, bias, stride, *,
                         max_band_positions=1024,
                         compute_dtype=jnp.bfloat16,
                         fuse_vmem_budget=4 * 1024 * 1024):
    """Forward of GDownsamplingBlock.

    x_nchw : [B, Cin, H, W], weight: [Cout, Cin, 3, 3], bias: [Cout]
    returns [B, Cout, H_out, W_out]
    """
    B, Cin, H, W = x_nchw.shape
    Cout = weight.shape[0]
    assert weight.shape == (Cout, Cin, 3, 3), weight.shape
    s = int(stride)

    H_out = (H + 2 - 3) // s + 1
    W_out = (W + 2 - 3) // s + 1
    HW = H_out * W_out
    out_dtype = x_nchw.dtype
    out_bytes = jnp.dtype(out_dtype).itemsize
    cmp_bytes = jnp.dtype(compute_dtype).itemsize

    # Band choice: bounded both by the user budget and by the f32 [Cout, tile]
    # matmul-result footprint (review: keep it ~<=128 KB so it never spills).
    max_pos = min(max_band_positions, max(128, (128 * 1024) // (4 * Cout)))
    band_rows = _pick_band_rows(H_out, W_out, max_pos)
    n_bands = H_out // band_rows
    tile = band_rows * W_out

    # ---- glue: NCHW -> NHWC (compute dtype), pad, s x s phase split. --------
    # Pure layout, no tap duplication (the 3/s expansion from the previous
    # revision is gone).
    Hq = H_out + 2 // s
    Wq = W_out + 2 // s
    Hp, Wp = s * Hq, s * Wq
    x_nhwc = jnp.transpose(x_nchw.astype(compute_dtype), (0, 2, 3, 1))
    x_pad = jnp.pad(x_nhwc, ((0, 0),
                             (1, max(Hp - H - 1, 0)),
                             (1, max(Wp - W - 1, 0)),
                             (0, 0)))[:, :Hp, :Wp, :]
    # x_pp[b, jh, jw, q, p, c] == x_pad[b, q*s + jh, p*s + jw, c]
    x_pp = x_pad.reshape(B, Hq, s, Wq, s, Cin).transpose(0, 2, 4, 1, 3, 5)

    # weight [Cout, Cin, 3, 3] -> [Cout, 9*Cin] with K ordered (kh, kw, cin) to
    # match the in-kernel tap concatenation (fused-K matmul).
    w2d = jnp.transpose(weight, (0, 2, 3, 1)).reshape(Cout, 9 * Cin)
    w2d = w2d.astype(compute_dtype)
    del bias  # exactly cancelled by InstanceNorm2d(affine=False), see kernel

    x_block_bytes = s * s * Hq * Wq * Cin * cmp_bytes
    w_bytes = Cout * 9 * Cin * cmp_bytes
    band_tmp_bytes = Cout * tile * 4 + tile * 9 * Cin * 4

    x_spec = pl.BlockSpec((1, s, s, Hq, Wq, Cin),
                          lambda b, t: (b, 0, 0, 0, 0, 0))
    w_spec = pl.BlockSpec((Cout, 9 * Cin), lambda b, t: (0, 0))

    fused = (Cout * HW * 4) <= fuse_vmem_budget

    if fused:
        # -------- single fused kernel: conv + InstanceNorm + ReLU ------------
        out_block_bytes = Cout * HW * out_bytes
        est = (2 * x_block_bytes + 2 * out_block_bytes + 3 * Cout * HW * 4
               + w_bytes + band_tmp_bytes + (1 << 20))
        out_flat = pl.pallas_call(
            functools.partial(_fused_conv_in_relu_kernel, stride=s,
                              band_rows=band_rows, w_out=W_out,
                              n_bands=n_bands, hw_total=HW, eps=1e-5),
            out_shape=jax.ShapeDtypeStruct((B, Cout, HW), out_dtype),
            grid_spec=pltpu.PrefetchScalarGridSpec(
                num_scalar_prefetch=0,
                grid=(B, n_bands),
                in_specs=[x_spec, w_spec],
                out_specs=pl.BlockSpec((1, Cout, HW), lambda b, t: (b, 0, 0)),
                scratch_shapes=[pltpu.VMEM((Cout, 1), jnp.float32)],
            ),
            compiler_params=pltpu.CompilerParams(
                dimension_semantics=("parallel", "arbitrary"),
                vmem_limit_bytes=_vmem_limit(est)),
        )(x_pp, w2d)
        return out_flat.reshape(B, Cout, H_out, W_out)

    # -------- fallback: conv + streamed stats, then decoupled norm + ReLU ----
    conv_dtype = compute_dtype   # bf16 intermediate halves the HBM round trip
    conv_bytes = jnp.dtype(conv_dtype).itemsize
    est1 = (2 * x_block_bytes + 2 * Cout * tile * conv_bytes + 2 * Cout * 2 * 4
            + w_bytes + band_tmp_bytes + (1 << 20))
    conv_raw, stats = pl.pallas_call(
        functools.partial(_conv_stats_kernel, stride=s, band_rows=band_rows,
                          w_out=W_out, n_bands=n_bands),
        out_shape=(jax.ShapeDtypeStruct((B, Cout, HW), conv_dtype),
                   jax.ShapeDtypeStruct((B, Cout, 2), jnp.float32)),
        grid_spec=pltpu.PrefetchScalarGridSpec(
            num_scalar_prefetch=0,
            grid=(B, n_bands),
            in_specs=[x_spec, w_spec],
            out_specs=[
                pl.BlockSpec((1, Cout, tile), lambda b, t: (b, 0, t)),
                pl.BlockSpec((1, Cout, 2), lambda b, t: (b, 0, 0)),
            ],
            scratch_shapes=[pltpu.VMEM((Cout, 1), jnp.float32),
                            pltpu.VMEM((Cout, 1), jnp.float32)],
        ),
        compiler_params=pltpu.CompilerParams(
            dimension_semantics=("parallel", "arbitrary"),
            vmem_limit_bytes=_vmem_limit(est1)),
    )(x_pp, w2d)

    chunk = _pick_norm_chunk(HW)
    n_chunks = HW // chunk
    est2 = 2 * Cout * chunk * (conv_bytes + out_bytes) + 8 * Cout * 4 + (1 << 20)
    out_flat = pl.pallas_call(
        functools.partial(_norm_relu_kernel, hw_total=HW, eps=1e-5),
        out_shape=jax.ShapeDtypeStruct((B, Cout, HW), out_dtype),
        grid_spec=pltpu.PrefetchScalarGridSpec(
            num_scalar_prefetch=0,
            grid=(B, n_chunks),
            in_specs=[
                pl.BlockSpec((1, Cout, chunk), lambda b, c: (b, 0, c)),
                pl.BlockSpec((1, Cout, 2), lambda b, c: (b, 0, 0)),
            ],
            out_specs=pl.BlockSpec((1, Cout, chunk), lambda b, c: (b, 0, c)),
        ),
        compiler_params=pltpu.CompilerParams(
            dimension_semantics=("parallel", "parallel"),
            vmem_limit_bytes=_vmem_limit(est2)),
    )(conv_raw, stats)

    return out_flat.reshape(B, Cout, H_out, W_out)


# -----------------------------------------------------------------------------
# Reference + self-test.
# -----------------------------------------------------------------------------

def _reference(x, weight, bias, stride, compute_dtype=None):
    xw = x if compute_dtype is None else x.astype(compute_dtype)
    ww = weight if compute_dtype is None else weight.astype(compute_dtype)
    y = lax.conv_general_dilated(
        xw, ww, window_strides=(stride, stride), padding=((1, 1), (1, 1)),
        dimension_numbers=("NCHW", "OIHW", "NCHW"),
        preferred_element_type=jnp.float32)
    y = y + bias.astype(jnp.float32).reshape(1, -1, 1, 1)
    mean = jnp.mean(y, axis=(2, 3), keepdims=True)
    var = jnp.mean((y - mean) ** 2, axis=(2, 3), keepdims=True)
    return jnp.maximum((y - mean) * lax.rsqrt(var + 1e-5), 0.0)


if __name__ == "__main__":
    key = jax.random.PRNGKey(0)
    f32, bf16 = jnp.float32, jnp.bfloat16

    cases = [
        # (B, Cin, Cout, H, W, stride, max_band, compute_dtype, fuse_budget, tol)
        (2, 4, 8, 16, 16, 2, 1024, bf16, 4 << 20, 1e-3),  # typical downsample, fused, 1 band
        (2, 4, 8, 16, 16, 1, 128,  bf16, 4 << 20, 1e-3),  # stride-1, fused, 2 bands
        (2, 4, 8, 32, 32, 2, 128,  bf16, 4 << 20, 1e-3),  # larger spatial, fused, 2 bands
        (1, 3, 8, 15, 15, 2, 1024, f32,  4 << 20, 2e-4),  # odd input, Cin=3, f32, fused
        (2, 4, 8, 16, 16, 1, 128,  f32,  0,       2e-4),  # forced two-pass fallback path
    ]

    for i, (B, Cin, Cout, H, W, s, max_band, cdt, budget, tol) in enumerate(cases):
        key, kx, kw_, kb = jax.random.split(key, 4)
        x = jax.random.normal(kx, (B, Cin, H, W), dtype=jnp.float32)
        weight = jax.random.normal(kw_, (Cout, Cin, 3, 3), dtype=jnp.float32) * 0.1
        bias = jax.random.normal(kb, (Cout,), dtype=jnp.float32) * 0.1

        out = g_downsampling_block(x, weight, bias, s,
                                   max_band_positions=max_band,
                                   compute_dtype=cdt,
                                   fuse_vmem_budget=budget)
        out = jax.block_until_ready(out)

        H_out = (H + 2 - 3) // s + 1
        W_out = (W + 2 - 3) // s + 1
        assert out.shape == (B, Cout, H_out, W_out), (i, out.shape)

        # Matched-precision reference (same input rounding as the kernel).
        ref_m = _reference(x, weight, bias, s,
                           compute_dtype=None if cdt == jnp.float32 else cdt)
        err = float(jnp.max(jnp.abs(out - ref_m)))
        assert err < tol, f"case {i}: max abs err vs matched ref {err}"

        # Loose semantic sanity check against the full-f32 module.
        ref_f = _reference(x, weight, bias, s)
        err32 = float(jnp.max(jnp.abs(out - ref_f)))
        assert err32 < 5e-2, f"case {i}: max abs err vs f32 ref {err32}"

    print("KERNEL_OK")
</pallas_src>

<mosaic_0001>
module attributes {stable_mosaic.version = 11 : i64} {
  func.func @_fused_conv_in_relu_kernel(%arg0: i32, %arg1: i32, %arg2: memref<1x2x2x9x9x4xbf16, #tpu.memory_space<vmem>>, %arg3: memref<8x36xbf16, #tpu.memory_space<vmem>>, %arg4: memref<1x8x64xf32, #tpu.memory_space<vmem>>, %arg5: memref<8x1xf32, #tpu.memory_space<vmem>>) attributes {dimension_semantics = [#tpu.dimension_semantics<parallel>, #tpu.dimension_semantics<arbitrary>], iteration_bounds = array<i64: 2, 1>, scalar_prefetch = 0 : i64, scratch_operands = 1 : i64, tpu.core_type = #tpu.core_type<tc>, window_params = [{transform_indices = @transform_0, window_bounds = array<i64: 1, 2, 2, 9, 9, 4>}, {pipeline_mode = #tpu.pipeline_mode<synchronous>, transform_indices = @transform_1, window_bounds = array<i64: 8, 36>}, {transform_indices = @transform_2, window_bounds = array<i64: 1, 8, 64>}]} {
    %c0_i32 = arith.constant 0 : i32
    %0 = arith.cmpi eq, %arg1, %c0_i32 : i32
    %1 = arith.extui %0 : i1 to i32
    %c0_i32_0 = arith.constant 0 : i32
    %2 = arith.cmpi ne, %1, %c0_i32_0 : i32
    scf.if %2 {
      %cst_64 = arith.constant 0.000000e+00 : f32
      %63 = vector.broadcast %cst_64 : f32 to vector<8x1xf32>
      %c0_65 = arith.constant 0 : index
      %c0_66 = arith.constant 0 : index
      %64 = vector.load %arg5[%c0_65, %c0_66] : memref<8x1xf32, #tpu.memory_space<vmem>>, vector<8x1xf32>
      tpu.vector_store %arg5[%c0_65, %c0_66], %63 {strides = array<i32>} : memref<8x1xf32, #tpu.memory_space<vmem>>, vector<8x1xf32>,
    } else {
    }
    %c8_i32 = arith.constant 8 : i32
    %3 = arith.muli %arg1, %c8_i32 : i32
    %c0_i32_1 = arith.constant 0 : i32
    %4 = arith.addi %3, %c0_i32_1 : i32
    %c0 = arith.constant 0 : index
    %c0_2 = arith.constant 0 : index
    %c0_3 = arith.constant 0 : index
    %5 = arith.index_cast %4 : i32 to index
    %c0_4 = arith.constant 0 : index
    %c0_5 = arith.constant 0 : index
    %6 = vector.load %arg2[%c0, %c0_2, %c0_3, %5, %c0_4, %c0_5] : memref<1x2x2x9x9x4xbf16, #tpu.memory_space<vmem>>, vector<1x1x1x8x8x4xbf16>
    %7 = vector.shape_cast %6 : vector<1x1x1x8x8x4xbf16> to vector<8x8x4xbf16>
    %8 = vector.shape_cast %7 : vector<8x8x4xbf16> to vector<64x4xbf16>
    %c0_i32_6 = arith.constant 0 : i32
    %9 = arith.addi %3, %c0_i32_6 : i32
    %c0_7 = arith.constant 0 : index
    %c0_8 = arith.constant 0 : index
    %c1 = arith.constant 1 : index
    %10 = arith.index_cast %9 : i32 to index
    %c0_9 = arith.constant 0 : index
    %c0_10 = arith.constant 0 : index
    %11 = vector.load %arg2[%c0_7, %c0_8, %c1, %10, %c0_9, %c0_10] : memref<1x2x2x9x9x4xbf16, #tpu.memory_space<vmem>>, vector<1x1x1x8x8x4xbf16>
    %12 = vector.shape_cast %11 : vector<1x1x1x8x8x4xbf16> to vector<8x8x4xbf16>
    %13 = vector.shape_cast %12 : vector<8x8x4xbf16> to vector<64x4xbf16>
    %c0_i32_11 = arith.constant 0 : i32
    %14 = arith.addi %3, %c0_i32_11 : i32
    %c0_12 = arith.constant 0 : index
    %c0_13 = arith.constant 0 : index
    %c0_14 = arith.constant 0 : index
    %15 = arith.index_cast %14 : i32 to index
    %c1_15 = arith.constant 1 : index
    %c0_16 = arith.constant 0 : index
    %16 = vector.load %arg2[%c0_12, %c0_13, %c0_14, %15, %c1_15, %c0_16] : memref<1x2x2x9x9x4xbf16, #tpu.memory_space<vmem>>, vector<1x1x1x8x8x4xbf16>
    %17 = vector.shape_cast %16 : vector<1x1x1x8x8x4xbf16> to vector<8x8x4xbf16>
    %18 = vector.shape_cast %17 : vector<8x8x4xbf16> to vector<64x4xbf16>
    %c0_i32_17 = arith.constant 0 : i32
    %19 = arith.addi %3, %c0_i32_17 : i32
    %c0_18 = arith.constant 0 : index
    %c1_19 = arith.constant 1 : index
    %c0_20 = arith.constant 0 : index
    %20 = arith.index_cast %19 : i32 to index
    %c0_21 = arith.constant 0 : index
    %c0_22 = arith.constant 0 : index
    %21 = vector.load %arg2[%c0_18, %c1_19, %c0_20, %20, %c0_21, %c0_22] : memref<1x2x2x9x9x4xbf16, #tpu.memory_space<vmem>>, vector<1x1x1x8x8x4xbf16>
    %22 = vector.shape_cast %21 : vector<1x1x1x8x8x4xbf16> to vector<8x8x4xbf16>
    %23 = vector.shape_cast %22 : vector<8x8x4xbf16> to vector<64x4xbf16>
    %c0_i32_23 = arith.constant 0 : i32
    %24 = arith.addi %3, %c0_i32_23 : i32
    %c0_24 = arith.constant 0 : index
    %c1_25 = arith.constant 1 : index
    %c1_26 = arith.constant 1 : index
    %25 = arith.index_cast %24 : i32 to index
    %c0_27 = arith.constant 0 : index
    %c0_28 = arith.constant 0 : index
    %26 = vector.load %arg2[%c0_24, %c1_25, %c1_26, %25, %c0_27, %c0_28] : memref<1x2x2x9x9x4xbf16, #tpu.memory_space<vmem>>, vector<1x1x1x8x8x4xbf16>
    %27 = vector.shape_cast %26 : vector<1x1x1x8x8x4xbf16> to vector<8x8x4xbf16>
    %28 = vector.shape_cast %27 : vector<8x8x4xbf16> to vector<64x4xbf16>
    %c0_i32_29 = arith.constant 0 : i32
    %29 = arith.addi %3, %c0_i32_29 : i32
    %c0_30 = arith.constant 0 : index
    %c1_31 = arith.constant 1 : index
    %c0_32 = arith.constant 0 : index
    %30 = arith.index_cast %29 : i32 to index
    %c1_33 = arith.constant 1 : index
    %c0_34 = arith.constant 0 : index
    %31 = vector.load %arg2[%c0_30, %c1_31, %c0_32, %30, %c1_33, %c0_34] : memref<1x2x2x9x9x4xbf16, #tpu.memory_space<vmem>>, vector<1x1x1x8x8x4xbf16>
    %32 = vector.shape_cast %31 : vector<1x1x1x8x8x4xbf16> to vector<8x8x4xbf16>
    %33 = vector.shape_cast %32 : vector<8x8x4xbf16> to vector<64x4xbf16>
    %c1_i32 = arith.constant 1 : i32
    %34 = arith.addi %3, %c1_i32 : i32
    %c0_35 = arith.constant 0 : index
    %c0_36 = arith.constant 0 : index
    %c0_37 = arith.constant 0 : index
    %35 = arith.index_cast %34 : i32 to index
    %c0_38 = arith.constant 0 : index
    %c0_39 = arith.constant 0 : index
    %36 = vector.load %arg2[%c0_35, %c0_36, %c0_37, %35, %c0_38, %c0_39] : memref<1x2x2x9x9x4xbf16, #tpu.memory_space<vmem>>, vector<1x1x1x8x8x4xbf16>
    %37 = vector.shape_cast %36 : vector<1x1x1x8x8x4xbf16> to vector<8x8x4xbf16>
    %38 = vector.shape_cast %37 : vector<8x8x4xbf16> to vector<64x4xbf16>
    %c1_i32_40 = arith.constant 1 : i32
    %39 = arith.addi %3, %c1_i32_40 : i32
    %c0_41 = arith.constant 0 : index
    %c0_42 = arith.constant 0 : index
    %c1_43 = arith.constant 1 : index
    %40 = arith.index_cast %39 : i32 to index
    %c0_44 = arith.constant 0 : index
    %c0_45 = arith.constant 0 : index
    %41 = vector.load %arg2[%c0_41, %c0_42, %c1_43, %40, %c0_44, %c0_45] : memref<1x2x2x9x9x4xbf16, #tpu.memory_space<vmem>>, vector<1x1x1x8x8x4xbf16>
    %42 = vector.shape_cast %41 : vector<1x1x1x8x8x4xbf16> to vector<8x8x4xbf16>
    %43 = vector.shape_cast %42 : vector<8x8x4xbf16> to vector<64x4xbf16>
    %c1_i32_46 = arith.constant 1 : i32
    %44 = arith.addi %3, %c1_i32_46 : i32
    %c0_47 = arith.constant 0 : index
    %c0_48 = arith.constant 0 : index
    %c0_49 = arith.constant 0 : index
    %45 = arith.index_cast %44 : i32 to index
    %c1_50 = arith.constant 1 : index
    %c0_51 = arith.constant 0 : index
    %46 = vector.load %arg2[%c0_47, %c0_48, %c0_49, %45, %c1_50, %c0_51] : memref<1x2x2x9x9x4xbf16, #tpu.memory_space<vmem>>, vector<1x1x1x8x8x4xbf16>
    %47 = vector.shape_cast %46 : vector<1x1x1x8x8x4xbf16> to vector<8x8x4xbf16>
    %48 = vector.shape_cast %47 : vector<8x8x4xbf16> to vector<64x4xbf16>
    %49 = tpu.concatenate %8, %13, %18, %23, %28, %33, %38, %43, %48 in 1 : vector<64x4xbf16>, vector<64x4xbf16>, vector<64x4xbf16>, vector<64x4xbf16>, vector<64x4xbf16>, vector<64x4xbf16>, vector<64x4xbf16>, vector<64x4xbf16>, vector<64x4xbf16> -> vector<64x36xbf16>
    %c0_52 = arith.constant 0 : index
    %c0_53 = arith.constant 0 : index
    %50 = vector.load %arg3[%c0_52, %c0_53] : memref<8x36xbf16, #tpu.memory_space<vmem>>, vector<8x36xbf16>
    %cst = arith.constant dense<0.000000e+00> : vector<8x64xf32>
    %51 = tpu.matmul %50, %49, %cst {dimension_numbers = #tpu.dot_dimension_numbers<[1], [1], [0], [0], [0, 0, 1, 0], [], []>} : vector<8x36xbf16>, vector<64x36xbf16>, vector<8x64xf32> -> vector<8x64xf32>
    %c0_54 = arith.constant 0 : index
    %c0_55 = arith.constant 0 : index
    %52 = vector.load %arg5[%c0_54, %c0_55] : memref<8x1xf32, #tpu.memory_space<vmem>>, vector<8x1xf32>
    %cst_56 = arith.constant dense<0.000000e+00> : vector<8xf32>
    %53 = vector.multi_reduction <add>, %51, %cst_56 [1] : vector<8x64xf32> to vector<8xf32>
    %54 = vector.shape_cast %53 : vector<8xf32> to vector<8x1xf32>
    %55 = arith.addf %52, %54 : vector<8x1xf32>
    %c0_57 = arith.constant 0 : index
    %c0_58 = arith.constant 0 : index
    %56 = vector.load %arg5[%c0_57, %c0_58] : memref<8x1xf32, #tpu.memory_space<vmem>>, vector<8x1xf32>
    tpu.vector_store %arg5[%c0_57, %c0_58], %55 {strides = array<i32>} : memref<8x1xf32, #tpu.memory_space<vmem>>, vector<8x1xf32>,
    %c0_59 = arith.constant 0 : index
    %c0_60 = arith.constant 0 : index
    %c0_61 = arith.constant 0 : index
    %57 = vector.load %arg4[%c0_59, %c0_60, %c0_61] : memref<1x8x64xf32, #tpu.memory_space<vmem>>, vector<1x8x64xf32>
    %58 = vector.shape_cast %57 : vector<1x8x64xf32> to vector<8x64xf32>
    %59 = vector.shape_cast %51 : vector<8x64xf32> to vector<1x8x64xf32>
    tpu.vector_store %arg4[%c0_59, %c0_60, %c0_61], %59 {strides = array<i32>} : memref<1x8x64xf32, #tpu.memory_space<vmem>>, vector<1x8x64xf32>,
    %c0_i32_62 = arith.constant 0 : i32
    %60 = arith.cmpi eq, %arg1, %c0_i32_62 : i32
    %61 = arith.extui %60 : i1 to i32
    %c0_i32_63 = arith.constant 0 : i32
    %62 = arith.cmpi ne, %61, %c0_i32_63 : i32
    scf.if %62 {
      %c0_64 = arith.constant 0 : index
      %c0_65 = arith.constant 0 : index
      %63 = vector.load %arg5[%c0_64, %c0_65] : memref<8x1xf32, #tpu.memory_space<vmem>>, vector<8x1xf32>
      %cst_66 = arith.constant 1.562500e-02 : f32
      %64 = vector.broadcast %cst_66 : f32 to vector<8x1xf32>
      %65 = arith.mulf %63, %64 : vector<8x1xf32>
      %c0_67 = arith.constant 0 : index
      %c0_68 = arith.constant 0 : index
      %c0_69 = arith.constant 0 : index
      %66 = vector.load %arg4[%c0_67, %c0_68, %c0_69] : memref<1x8x64xf32, #tpu.memory_space<vmem>>, vector<1x8x64xf32>
      %67 = vector.shape_cast %66 : vector<1x8x64xf32> to vector<8x64xf32>
      %68 = vector.broadcast %65 : vector<8x1xf32> to vector<8x64xf32>
      %69 = arith.subf %67, %68 : vector<8x64xf32>
      %70 = arith.mulf %69, %69 : vector<8x64xf32>
      %cst_70 = arith.constant dense<0.000000e+00> : vector<8xf32>
      %71 = vector.multi_reduction <add>, %70, %cst_70 [1] : vector<8x64xf32> to vector<8xf32>
      %72 = vector.shape_cast %71 : vector<8xf32> to vector<8x1xf32>
      %cst_71 = arith.constant 1.562500e-02 : f32
      %73 = vector.broadcast %cst_71 : f32 to vector<8x1xf32>
      %74 = arith.mulf %72, %73 : vector<8x1xf32>
      %cst_72 = arith.constant 9.99999974E-6 : f32
      %75 = vector.broadcast %cst_72 : f32 to vector<8x1xf32>
      %76 = arith.addf %74, %75 : vector<8x1xf32>
      %77 = math.rsqrt %76 : vector<8x1xf32>
      %78 = vector.broadcast %77 : vector<8x1xf32> to vector<8x64xf32>
      %79 = arith.mulf %69, %78 : vector<8x64xf32>
      %cst_73 = arith.constant 0.000000e+00 : f32
      %80 = vector.broadcast %cst_73 : f32 to vector<8x64xf32>
      %81 = arith.maximumf %79, %80 : vector<8x64xf32>
      %c0_74 = arith.constant 0 : index
      %c0_75 = arith.constant 0 : index
      %c0_76 = arith.constant 0 : index
      %82 = vector.load %arg4[%c0_74, %c0_75, %c0_76] : memref<1x8x64xf32, #tpu.memory_space<vmem>>, vector<1x8x64xf32>
      %83 = vector.shape_cast %82 : vector<1x8x64xf32> to vector<8x64xf32>
      %84 = vector.shape_cast %81 : vector<8x64xf32> to vector<1x8x64xf32>
      tpu.vector_store %arg4[%c0_74, %c0_75, %c0_76], %84 {strides = array<i32>} : memref<1x8x64xf32, #tpu.memory_space<vmem>>, vector<1x8x64xf32>,
    } else {
    }
    return
  }
  func.func @transform_0(%arg0: i32, %arg1: i32) -> (i32, i32, i32, i32, i32, i32) {
    %c0_i32 = arith.constant 0 : i32
    %c0_i32_0 = arith.constant 0 : i32
    %c0_i32_1 = arith.constant 0 : i32
    %c0_i32_2 = arith.constant 0 : i32
    %c0_i32_3 = arith.constant 0 : i32
    %c0_i32_4 = arith.constant 0 : i32
    return %arg0, %c0_i32, %c0_i32_0, %c0_i32_1, %c0_i32_2, %c0_i32_3 : i32, i32, i32, i32, i32, i32
  }
  func.func @transform_1(%arg0: i32, %arg1: i32) -> (i32, i32) {
    %c0_i32 = arith.constant 0 : i32
    %c0_i32_0 = arith.constant 0 : i32
    %c0_i32_1 = arith.constant 0 : i32
    return %c0_i32, %c0_i32_0 : i32, i32
  }
  func.func @transform_2(%arg0: i32, %arg1: i32) -> (i32, i32, i32) {
    %c0_i32 = arith.constant 0 : i32
    %c0_i32_0 = arith.constant 0 : i32
    %c0_i32_1 = arith.constant 0 : i32
    return %arg0, %c0_i32, %c0_i32_0 : i32, i32, i32
  }
}

</mosaic_0001>

<llo_original>
// kernel: g_downsampling_block.1
$region0: #{g_downsampling_block.1}
  #allocation0 [shape = 'u32[]', space=smem, size = 0x4, offset = 0x4, fixed_abs, tag = 'smem constant byte address 0x4 - core index']
  #allocation1 [shape = 'u32[144,128]{1,0:T(1,128)}', space=vmem, size = 0x12000, scoped, tag = 'internal scratch']
  #allocation2 [shape = 'f32[8,1]{1,0:T(8,128)}', space=vmem, size = 0x1000, scoped, tag = 'scratch operand']
  %s0 = inlined_call_operand.vmem [shape: bf16[2,2,2,9,9,4], index: 0, kind: input, shape index: {}]
  %s1 = inlined_call_operand.vmem [shape: bf16[8,36], index: 1, kind: input, shape index: {}]
  %s2 = inlined_call_operand.vmem [shape: f32[2,8,64], index: 2, kind: output, shape index: {}]
  %s3 = sld [smem:[#allocation0]]
  $region49: #{g_downsampling_block.1} parent=0
    _
  %s5 = ssub.s32 1, %s3
  %s6 = scalar_select 0, %s5, %s3
  loop: start=0, step=1, limit=4
  $region2: #{g_downsampling_block.1} parent=0 // loop_pre_header
    _
  $region3: #{g_downsampling_block.1} parent=0 // loop_header
    %s8 = sphi 0, %s12
    %p9 = scmp.ge.s32.totalorder %s8, 4
    %s15 = sphi 0, %s27
    %s16 = sphi 0, %s23
    %s17 = sphi 0, %s15
    %s18 = sphi 0, %s16
    %s19 = sphi 0, %s17
    %s20 = sphi 0, %s18
    %s30 = sphi 0, %s32
    %s33 = sphi 0, %s30
    %s34 = sphi 0, %s33
    %s50 = sphi 0, %s34
    %s54 = sphi 0, %s54
    %s56 = sphi 0, %s54
    %s57 = sphi 0, %s56
    %s71 = sphi 0, %s57
    %s77 = sphi 0, %s79
    %s80 = sphi 0, %s77
    %s81 = sphi 0, %s80
    %s97 = sphi 0, %s81
  $region4: #{g_downsampling_block.1} parent=0 // loop_header_branch
    %11 = sbr.rel (%p9) target = $region8
  $region5: #{g_downsampling_block.1} parent=0 // loop_body
    %s13 = ssub.s32 %s8, 1
    %s14 = ssub.s32 %s8, 2
    %s21 = sadd.s32 1, %s16
    %p22 = scmp.ge.s32.totalorder %s21, 1
    %s23 = scalar_select %p22, 0, %s21
    %s24 = sadd.s32 1, %s15
    %s25 = scalar_select %p22, %s24, %s15
    %p26 = scmp.ge.s32.totalorder %s25, 2
    %s27 = scalar_select %p26, 0, %s25
    %s28 = ssub.s32 %s15, %s27
    %p29 = scmp.eq.s32.totalorder %s28, 0
    %s31 = sadd.s32 %s30, 1
    %s32 = scalar_select %p29, %s30, %s31
    %p35 = pneg %p29
    %p36 = scmp.eq.s32.totalorder %s8, 1
    %p37 = por %p35, %p36
    %p38 = scmp.ne.s32.totalorder %s30, %s33
    %p39 = scmp.eq.s32.totalorder %s8, 0
    %p40 = por %p38, %p39
    %p41 = scmp.ne.s32.totalorder %s30, %s33
    %p42 = scmp.eq.s32.totalorder %s13, 1
    %p43 = por %p41, %p42
    %p44 = scmp.ne.s32.totalorder %s33, %s34
    %p45 = scmp.eq.s32.totalorder %s13, 0
    %p46 = por %p44, %p45
    %p47 = scmp.ne.s32.totalorder %s33, %s34
    %p48 = scmp.eq.s32.totalorder %s14, 1
    %p49 = por %p47, %p48
    %p51 = scmp.ne.s32.totalorder %s34, %s50
    %p52 = scmp.eq.s32.totalorder %s14, 0
    %p53 = por %p51, %p52
    %s55 = sadd.s32 %s54, 1
    %p58 = scmp.eq.s32.totalorder %s8, 1
    %p59 = scmp.ne.s32.totalorder %s54, %s56
    %p60 = scmp.eq.s32.totalorder %s8, 0
    %p61 = por %p59, %p60
    %p62 = scmp.ne.s32.totalorder %s54, %s56
    %p63 = scmp.eq.s32.totalorder %s13, 1
    %p64 = por %p62, %p63
    %p65 = scmp.ne.s32.totalorder %s56, %s57
    %p66 = scmp.eq.s32.totalorder %s13, 0
    %p67 = por %p65, %p66
    %p68 = scmp.ne.s32.totalorder %s56, %s57
    %p69 = scmp.eq.s32.totalorder %s14, 1
    %p70 = por %p68, %p69
    %p72 = scmp.ne.s32.totalorder %s57, %s71
    %p73 = scmp.eq.s32.totalorder %s14, 0
    %p74 = por %p72, %p73
    %s75 = ssub.s32 %s15, %s27
    %p76 = scmp.eq.s32.totalorder %s75, 0
    %s78 = sadd.s32 %s77, 1
    %s79 = scalar_select %p76, %s77, %s78
    %p82 = pneg %p76
    %p83 = scmp.eq.s32.totalorder %s8, 1
    %p84 = por %p82, %p83
    %p85 = scmp.ne.s32.totalorder %s77, %s80
    %p86 = scmp.eq.s32.totalorder %s8, 0
    %p87 = por %p85, %p86
    %p88 = scmp.ne.s32.totalorder %s77, %s80
    %p89 = scmp.eq.s32.totalorder %s13, 1
    %p90 = por %p88, %p89
    %p91 = scmp.ne.s32.totalorder %s80, %s81
    %p92 = scmp.eq.s32.totalorder %s13, 0
    %p93 = por %p91, %p92
    %p94 = scmp.ne.s32.totalorder %s80, %s81
    %p95 = scmp.eq.s32.totalorder %s14, 1
    %p96 = por %p94, %p95
    %p98 = scmp.ne.s32.totalorder %s81, %s97
    %p99 = scmp.eq.s32.totalorder %s14, 0
    %p100 = por %p98, %p99
    %p101 = scmp.le.s32.totalorder 1, %s8
    %p102 = scmp.lt.s32.totalorder %s8, 3
    %p103 = pnand %p101, %p102
    %p104 = pneg %p103
    // Predicated region
    $region9: #{g_downsampling_block.1} parent=5 // pred_check
      _
    $region10: #{g_downsampling_block.1} parent=5 // pred_check_branch
      %106 = sbr.rel (%p103) target = $region12
    $region11: #{g_downsampling_block.1} parent=5 // pred_region
      %s107 = ssub.s32 %s8, 1
      // Predicated region
      $region13: #{g_downsampling_block.1} parent=11 // pred_check
        %p108 = pneg %p67
      $region14: #{g_downsampling_block.1} parent=11 // pred_check_branch
        %110 = sbr.rel (%p108) target = $region16
      $region15: #{g_downsampling_block.1} parent=11 // pred_region
        _
      $region16: #{g_downsampling_block.1} parent=11 // pred_fallthru
        _
    $region12: #{g_downsampling_block.1} parent=5 // pred_fallthru
      _
    %p111 = scmp.lt.s32.totalorder %s8, 2
    // Predicated region
    $region17: #{g_downsampling_block.1} parent=5 // pred_check
      %p112 = pneg %p111
    $region18: #{g_downsampling_block.1} parent=5 // pred_check_branch
      %114 = sbr.rel (%p112) target = $region20
    $region19: #{g_downsampling_block.1} parent=5 // pred_region
      // Predicated region
      $region21: #{g_downsampling_block.1} parent=19 // pred_check
        %p115 = pneg %p40
      $region22: #{g_downsampling_block.1} parent=19 // pred_check_branch
        %117 = sbr.rel (%p115) target = $region24
      $region23: #{g_downsampling_block.1} parent=19 // pred_region
        %p118 = scmp.lt.s32.totalorder %s15, 1
        %s119 = scalar_select %p118, %s15, 1
        %s120 = smul.addr %s119, 72
        %s121 = smul.addr %s120, 4
        %s122 = scalar_lea.vmem %s0, %s121
      $region24: #{g_downsampling_block.1} parent=19 // pred_fallthru
        _
    $region20: #{g_downsampling_block.1} parent=5 // pred_fallthru
      _
    %p123 = scmp.le.s32.totalorder 1, %s8
    %p124 = scmp.lt.s32.totalorder %s8, 3
    %p125 = pnand %p123, %p124
    %p126 = pneg %p125
    // Predicated region
    $region25: #{g_downsampling_block.1} parent=5 // pred_check
      _
    $region26: #{g_downsampling_block.1} parent=5 // pred_check_branch
      %128 = sbr.rel (%p125) target = $region28
    $region27: #{g_downsampling_block.1} parent=5 // pred_region
      %s129 = ssub.s32 %s8, 1
      %p130 = scmp.lt.s32.totalorder %s17, 1
      %s131 = scalar_select %p130, %s17, 1
      %s132 = smul.addr %s131, 72
      %s133 = smul.addr %s132, 4
      %s134 = scalar_lea.vmem %s0, %s133
      %p135 = pneg %p46
      %p136 = pneg %p43
      %p137 = pneg %p67
      %p138 = pneg %p64
      %p139 = pneg %p93
      %p140 = pneg %p90
      %p141 = scmp.lt.s32.totalorder %s17, 1
      %s142 = scalar_select %p141, %s17, 1
      %s143 = smul.addr %s142, 8
      %s144 = scalar_lea.vmem %s2, %s143
      %p145 = scmp.lt.s32.totalorder %s17, 1
      %s146 = scalar_select %p145, %s17, 1
      %s147 = smul.addr %s146, 72
      %s148 = smul.addr %s147, 4
      %s149 = scalar_lea.vmem %s0, %s148
      %p150 = scmp.lt.s32.totalorder %s17, 1
      %s151 = scalar_select %p150, %s17, 1
      %s152 = smul.addr %s151, 8
      %s153 = scalar_lea.vmem %s2, %s152
      %p155 = scmp.eq.s32.totalorder %s18, 0
      // Predicated region
      $region29: #{g_downsampling_block.1} parent=27 // pred_check
        %p156 = pneg %p155
      $region30: #{g_downsampling_block.1} parent=27 // pred_check_branch
        %158 = sbr.rel (%p156) target = $region32
      $region31: #{g_downsampling_block.1} parent=27 // pred_region
        %vm159 = vcmask 7168
        %160 = vst.msk [vmem:[#allocation2] sm:$0xff] %vm159, 0.0
      $region32: #{g_downsampling_block.1} parent=27 // pred_fallthru
        _
      %s161 = smul.u32 %s18, 8
      %s162 = smul.u32 %s161, 2
      %s163 = smul.addr %s162, 4
      %s164 = scalar_lea.vmem %s149, %s163
      %v165 = vld [vmem:[%s164] sm:$0xf]
      %v166 = vld [vmem:[%s164 + $0x8] sm:$0xf]
      %v167 = vld [vmem:[%s164 + $0x10] sm:$0xf]
      %v168 = vld [vmem:[%s164 + $0x18] sm:$0xf]
      %v169 = vld [vmem:[%s164 + $0x20] sm:$0xf]
      %v170 = vld [vmem:[%s164 + $0x28] sm:$0xf]
      %v171 = vld [vmem:[%s164 + $0x30] sm:$0xf]
      %v172 = vld [vmem:[%s164 + $0x38] sm:$0xf]
      %s173 = sadd.s32 %s162, 18
      %s174 = smul.addr %s173, 4
      %s175 = scalar_lea.vmem %s149, %s174
      %v176 = vld [vmem:[%s175] sm:$0xf]
      %v177 = vld [vmem:[%s175 + $0x8] sm:$0xf]
      %v178 = vld [vmem:[%s175 + $0x10] sm:$0xf]
      %v179 = vld [vmem:[%s175 + $0x18] sm:$0xf]
      %v180 = vld [vmem:[%s175 + $0x20] sm:$0xf]
      %v181 = vld [vmem:[%s175 + $0x28] sm:$0xf]
      %v182 = vld [vmem:[%s175 + $0x30] sm:$0xf]
      %v183 = vld [vmem:[%s175 + $0x38] sm:$0xf]
      %v184 = vld [vmem:[%s164 + $0x4] sm:$0x1]
      %v185 = vld [vmem:[%s164 + $0xc] sm:$0x1]
      %v186 = vld [vmem:[%s164 + $0x14] sm:$0x1]
      %v187 = vld [vmem:[%s164 + $0x1c] sm:$0x1]
      %v188 = vld [vmem:[%s164 + $0x24] sm:$0x1]
      %v189 = vld [vmem:[%s164 + $0x2c] sm:$0x1]
      %v190 = vld [vmem:[%s164 + $0x34] sm:$0x1]
      %v191 = vld [vmem:[%s164 + $0x3c] sm:$0x1]
      %vm192 = vsmask.f32 3328
      %vm193 = vsmask.f32 7440
      %vm194 = vmor %vm192, %vm193
      %v196 = vshrl.u32 %v165, 16
      %v198 = vrot.slane %v196, 4
      %v199 = vshll.u32 %v165, 16
      %v201 = vrot.slane %v199, 5
      %v202 = vor.u32 %v198, %v201
      %v203 = vrot.slane %v202, 4
      %v205 = vshll.u32 %v184, 16
      %v207 = vrot.slane %v205, 5
      %v208 = vsel %vm194, %v203, %v207
      %v210 = vshrl.u32 %v166, 16
      %v212 = vrot.slane %v210, 4
      %v213 = vshll.u32 %v166, 16
      %v215 = vrot.slane %v213, 5
      %v216 = vor.u32 %v212, %v215
      %v217 = vrot.slane %v216, 4
      %v219 = vshll.u32 %v185, 16
      %v221 = vrot.slane %v219, 5
      %v222 = vsel %vm194, %v217, %v221
      %v224 = vshrl.u32 %v167, 16
      %v226 = vrot.slane %v224, 4
      %v227 = vshll.u32 %v167, 16
      %v229 = vrot.slane %v227, 5
      %v230 = vor.u32 %v226, %v229
      %v231 = vrot.slane %v230, 4
      %v233 = vshll.u32 %v186, 16
      %v235 = vrot.slane %v233, 5
      %v236 = vsel %vm194, %v231, %v235
      %v238 = vshrl.u32 %v168, 16
      %v240 = vrot.slane %v238, 4
      %v241 = vshll.u32 %v168, 16
      %v243 = vrot.slane %v241, 5
      %v244 = vor.u32 %v240, %v243
      %v245 = vrot.slane %v244, 4
      %v247 = vshll.u32 %v187, 16
      %v249 = vrot.slane %v247, 5
      %v250 = vsel %vm194, %v245, %v249
      %v252 = vshrl.u32 %v169, 16
      %v254 = vrot.slane %v252, 4
      %v255 = vshll.u32 %v169, 16
      %v257 = vrot.slane %v255, 5
      %v258 = vor.u32 %v254, %v257
      %v259 = vrot.slane %v258, 4
      %v261 = vshll.u32 %v188, 16
      %v263 = vrot.slane %v261, 5
      %v264 = vsel %vm194, %v259, %v263
      %v266 = vshrl.u32 %v170, 16
      %v268 = vrot.slane %v266, 4
      %v269 = vshll.u32 %v170, 16
      %v271 = vrot.slane %v269, 5
      %v272 = vor.u32 %v268, %v271
      %v273 = vrot.slane %v272, 4
      %v275 = vshll.u32 %v189, 16
      %v277 = vrot.slane %v275, 5
      %v278 = vsel %vm194, %v273, %v277
      %v280 = vshrl.u32 %v171, 16
      %v282 = vrot.slane %v280, 4
      %v283 = vshll.u32 %v171, 16
      %v285 = vrot.slane %v283, 5
      %v286 = vor.u32 %v282, %v285
      %v287 = vrot.slane %v286, 4
      %v289 = vshll.u32 %v190, 16
      %v291 = vrot.slane %v289, 5
      %v292 = vsel %vm194, %v287, %v291
      %v294 = vshrl.u32 %v172, 16
      %v296 = vrot.slane %v294, 4
      %v297 = vshll.u32 %v172, 16
      %v299 = vrot.slane %v297, 5
      %v300 = vor.u32 %v296, %v299
      %v301 = vrot.slane %v300, 4
      %v303 = vshll.u32 %v191, 16
      %v305 = vrot.slane %v303, 5
      %v306 = vsel %vm194, %v301, %v305
      %s307 = sadd.s32 %s162, 36
      %s308 = smul.addr %s307, 4
      %s309 = scalar_lea.vmem %s149, %s308
      %v310 = vld [vmem:[%s309] sm:$0xf]
      %v311 = vld [vmem:[%s309 + $0x8] sm:$0xf]
      %v312 = vld [vmem:[%s309 + $0x10] sm:$0xf]
      %v313 = vld [vmem:[%s309 + $0x18] sm:$0xf]
      %v314 = vld [vmem:[%s309 + $0x20] sm:$0xf]
      %v315 = vld [vmem:[%s309 + $0x28] sm:$0xf]
      %v316 = vld [vmem:[%s309 + $0x30] sm:$0xf]
      %v317 = vld [vmem:[%s309 + $0x38] sm:$0xf]
      %s318 = sadd.s32 %s173, 36
      %s319 = smul.addr %s318, 4
      %s320 = scalar_lea.vmem %s149, %s319
      %v321 = vld [vmem:[%s320] sm:$0xf]
      %v322 = vld [vmem:[%s320 + $0x8] sm:$0xf]
      %v323 = vld [vmem:[%s320 + $0x10] sm:$0xf]
      %v324 = vld [vmem:[%s320 + $0x18] sm:$0xf]
      %v325 = vld [vmem:[%s320 + $0x20] sm:$0xf]
      %v326 = vld [vmem:[%s320 + $0x28] sm:$0xf]
      %v327 = vld [vmem:[%s320 + $0x30] sm:$0xf]
      %v328 = vld [vmem:[%s320 + $0x38] sm:$0xf]
      %v329 = vld [vmem:[%s309 + $0x4] sm:$0x1]
      %v330 = vld [vmem:[%s309 + $0xc] sm:$0x1]
      %v331 = vld [vmem:[%s309 + $0x14] sm:$0x1]
      %v332 = vld [vmem:[%s309 + $0x1c] sm:$0x1]
      %v333 = vld [vmem:[%s309 + $0x24] sm:$0x1]
      %v334 = vld [vmem:[%s309 + $0x2c] sm:$0x1]
      %v335 = vld [vmem:[%s309 + $0x34] sm:$0x1]
      %v336 = vld [vmem:[%s309 + $0x3c] sm:$0x1]
      %v338 = vshrl.u32 %v310, 16
      %v340 = vrot.slane %v338, 4
      %v341 = vshll.u32 %v310, 16
      %v343 = vrot.slane %v341, 5
      %v344 = vor.u32 %v340, %v343
      %v345 = vrot.slane %v344, 4
      %v347 = vshll.u32 %v329, 16
      %v349 = vrot.slane %v347, 5
      %v350 = vsel %vm194, %v345, %v349
      %v352 = vshrl.u32 %v311, 16
      %v354 = vrot.slane %v352, 4
      %v355 = vshll.u32 %v311, 16
      %v357 = vrot.slane %v355, 5
      %v358 = vor.u32 %v354, %v357
      %v359 = vrot.slane %v358, 4
      %v361 = vshll.u32 %v330, 16
      %v363 = vrot.slane %v361, 5
      %v364 = vsel %vm194, %v359, %v363
      %v366 = vshrl.u32 %v312, 16
      %v368 = vrot.slane %v366, 4
      %v369 = vshll.u32 %v312, 16
      %v371 = vrot.slane %v369, 5
      %v372 = vor.u32 %v368, %v371
      %v373 = vrot.slane %v372, 4
      %v375 = vshll.u32 %v331, 16
      %v377 = vrot.slane %v375, 5
      %v378 = vsel %vm194, %v373, %v377
      %v380 = vshrl.u32 %v313, 16
      %v382 = vrot.slane %v380, 4
      %v383 = vshll.u32 %v313, 16
      %v385 = vrot.slane %v383, 5
      %v386 = vor.u32 %v382, %v385
      %v387 = vrot.slane %v386, 4
      %v389 = vshll.u32 %v332, 16
      %v391 = vrot.slane %v389, 5
      %v392 = vsel %vm194, %v387, %v391
      %v394 = vshrl.u32 %v314, 16
      %v396 = vrot.slane %v394, 4
      %v397 = vshll.u32 %v314, 16
      %v399 = vrot.slane %v397, 5
      %v400 = vor.u32 %v396, %v399
      %v401 = vrot.slane %v400, 4
      %v403 = vshll.u32 %v333, 16
      %v405 = vrot.slane %v403, 5
      %v406 = vsel %vm194, %v401, %v405
      %v408 = vshrl.u32 %v315, 16
      %v410 = vrot.slane %v408, 4
      %v411 = vshll.u32 %v315, 16
      %v413 = vrot.slane %v411, 5
      %v414 = vor.u32 %v410, %v413
      %v415 = vrot.slane %v414, 4
      %v417 = vshll.u32 %v334, 16
      %v419 = vrot.slane %v417, 5
      %v420 = vsel %vm194, %v415, %v419
      %v422 = vshrl.u32 %v316, 16
      %v424 = vrot.slane %v422, 4
      %v425 = vshll.u32 %v316, 16
      %v427 = vrot.slane %v425, 5
      %v428 = vor.u32 %v424, %v427
      %v429 = vrot.slane %v428, 4
      %v431 = vshll.u32 %v335, 16
      %v433 = vrot.slane %v431, 5
      %v434 = vsel %vm194, %v429, %v433
      %v436 = vshrl.u32 %v317, 16
      %v438 = vrot.slane %v436, 4
      %v439 = vshll.u32 %v317, 16
      %v441 = vrot.slane %v439, 5
      %v442 = vor.u32 %v438, %v441
      %v443 = vrot.slane %v442, 4
      %v445 = vshll.u32 %v336, 16
      %v447 = vrot.slane %v445, 5
      %v448 = vsel %vm194, %v443, %v447
      %s449 = sadd.s32 %s161, 1
      %s450 = smul.u32 %s449, 2
      %s451 = smul.addr %s450, 4
      %s452 = scalar_lea.vmem %s149, %s451
      %v453 = vld [vmem:[%s452] sm:$0xf]
      %v454 = vld [vmem:[%s452 + $0x8] sm:$0xf]
      %v455 = vld [vmem:[%s452 + $0x10] sm:$0xf]
      %v456 = vld [vmem:[%s452 + $0x18] sm:$0xf]
      %v457 = vld [vmem:[%s452 + $0x20] sm:$0xf]
      %v458 = vld [vmem:[%s452 + $0x28] sm:$0xf]
      %v459 = vld [vmem:[%s452 + $0x30] sm:$0xf]
      %v460 = vld [vmem:[%s452 + $0x38] sm:$0xf]
      %s461 = sadd.s32 %s450, 18
      %s462 = smul.addr %s461, 4
      %s463 = scalar_lea.vmem %s149, %s462
      %v464 = vld [vmem:[%s463] sm:$0xf]
      %v465 = vld [vmem:[%s463 + $0x8] sm:$0xf]
      %v466 = vld [vmem:[%s463 + $0x10] sm:$0xf]
      %v467 = vld [vmem:[%s463 + $0x18] sm:$0xf]
      %v468 = vld [vmem:[%s463 + $0x20] sm:$0xf]
      %v469 = vld [vmem:[%s463 + $0x28] sm:$0xf]
      %v470 = vld [vmem:[%s463 + $0x30] sm:$0xf]
      %v471 = vld [vmem:[%s463 + $0x38] sm:$0xf]
      %v472 = vld [vmem:[%s452 + $0x4] sm:$0x1]
      %v473 = vld [vmem:[%s452 + $0xc] sm:$0x1]
      %v474 = vld [vmem:[%s452 + $0x14] sm:$0x1]
      %v475 = vld [vmem:[%s452 + $0x1c] sm:$0x1]
      %v476 = vld [vmem:[%s452 + $0x24] sm:$0x1]
      %v477 = vld [vmem:[%s452 + $0x2c] sm:$0x1]
      %v478 = vld [vmem:[%s452 + $0x34] sm:$0x1]
      %v479 = vld [vmem:[%s452 + $0x3c] sm:$0x1]
      %v481 = vshrl.u32 %v453, 16
      %v483 = vrot.slane %v481, 4
      %v484 = vshll.u32 %v453, 16
      %v486 = vrot.slane %v484, 5
      %v487 = vor.u32 %v483, %v486
      %v488 = vrot.slane %v487, 4
      %v490 = vshll.u32 %v472, 16
      %v492 = vrot.slane %v490, 5
      %v493 = vsel %vm194, %v488, %v492
      %v495 = vshrl.u32 %v454, 16
      %v497 = vrot.slane %v495, 4
      %v498 = vshll.u32 %v454, 16
      %v500 = vrot.slane %v498, 5
      %v501 = vor.u32 %v497, %v500
      %v502 = vrot.slane %v501, 4
      %v504 = vshll.u32 %v473, 16
      %v506 = vrot.slane %v504, 5
      %v507 = vsel %vm194, %v502, %v506
      %v509 = vshrl.u32 %v455, 16
      %v511 = vrot.slane %v509, 4
      %v512 = vshll.u32 %v455, 16
      %v514 = vrot.slane %v512, 5
      %v515 = vor.u32 %v511, %v514
      %v516 = vrot.slane %v515, 4
      %v518 = vshll.u32 %v474, 16
      %v520 = vrot.slane %v518, 5
      %v521 = vsel %vm194, %v516, %v520
      %v523 = vshrl.u32 %v456, 16
      %v525 = vrot.slane %v523, 4
      %v526 = vshll.u32 %v456, 16
      %v528 = vrot.slane %v526, 5
      %v529 = vor.u32 %v525, %v528
      %v530 = vrot.slane %v529, 4
      %v532 = vshll.u32 %v475, 16
      %v534 = vrot.slane %v532, 5
      %v535 = vsel %vm194, %v530, %v534
      %v537 = vshrl.u32 %v457, 16
      %v539 = vrot.slane %v537, 4
      %v540 = vshll.u32 %v457, 16
      %v542 = vrot.slane %v540, 5
      %v543 = vor.u32 %v539, %v542
      %v544 = vrot.slane %v543, 4
      %v546 = vshll.u32 %v476, 16
      %v548 = vrot.slane %v546, 5
      %v549 = vsel %vm194, %v544, %v548
      %v551 = vshrl.u32 %v458, 16
      %v553 = vrot.slane %v551, 4
      %v554 = vshll.u32 %v458, 16
      %v556 = vrot.slane %v554, 5
      %v557 = vor.u32 %v553, %v556
      %v558 = vrot.slane %v557, 4
      %v560 = vshll.u32 %v477, 16
      %v562 = vrot.slane %v560, 5
      %v563 = vsel %vm194, %v558, %v562
      %v565 = vshrl.u32 %v459, 16
      %v567 = vrot.slane %v565, 4
      %v568 = vshll.u32 %v459, 16
      %v570 = vrot.slane %v568, 5
      %v571 = vor.u32 %v567, %v570
      %v572 = vrot.slane %v571, 4
      %v574 = vshll.u32 %v478, 16
      %v576 = vrot.slane %v574, 5
      %v577 = vsel %vm194, %v572, %v576
      %v579 = vshrl.u32 %v460, 16
      %v581 = vrot.slane %v579, 4
      %v582 = vshll.u32 %v460, 16
      %v584 = vrot.slane %v582, 5
      %v585 = vor.u32 %v581, %v584
      %v586 = vrot.slane %v585, 4
      %v588 = vshll.u32 %v479, 16
      %v590 = vrot.slane %v588, 5
      %v591 = vsel %vm194, %v586, %v590
      %v600 = vunpack.c.l.b16 %v165
      %v601 = vunpack.c.l.b16 %v166
      %v602 = vunpack.c.l.b16 %v167
      %v603 = vunpack.c.l.b16 %v168
      %v604 = vunpack.c.l.b16 %v169
      %v605 = vunpack.c.l.b16 %v170
      %v606 = vunpack.c.l.b16 %v171
      %v607 = vunpack.c.l.b16 %v172
      %v608 = vpack.c.b16 %v601, %v600
      %v609 = vpack.c.b16 %v603, %v602
      %v610 = vpack.c.b16 %v605, %v604
      %v611 = vpack.c.b16 %v607, %v606
      %v620 = vunpack.c.l.b16 %v176
      %v621 = vunpack.c.l.b16 %v177
      %v622 = vunpack.c.l.b16 %v178
      %v623 = vunpack.c.l.b16 %v179
      %v624 = vunpack.c.l.b16 %v180
      %v625 = vunpack.c.l.b16 %v181
      %v626 = vunpack.c.l.b16 %v182
      %v627 = vunpack.c.l.b16 %v183
      %v628 = vpack.c.b16 %v621, %v620
      %v629 = vpack.c.b16 %v623, %v622
      %v630 = vpack.c.b16 %v625, %v624
      %v631 = vpack.c.b16 %v627, %v626
      %632 = vrot.lane.b32.xlu0 %v628, 4
      %v633 = vpop.permute.xlu0 %632
      %634 = vrot.lane.b32.xlu0 %v629, 4
      %v635 = vpop.permute.xlu0 %634
      %636 = vrot.lane.b32.xlu0 %v630, 4
      %v637 = vpop.permute.xlu0 %636
      %638 = vrot.lane.b32.xlu0 %v631, 4
      %v639 = vpop.permute.xlu0 %638
      %v640 = vunpack.c.l.b16 %v208
      %v641 = vunpack.c.l.b16 %v222
      %v642 = vunpack.c.l.b16 %v236
      %v643 = vunpack.c.l.b16 %v250
      %v644 = vunpack.c.l.b16 %v264
      %v645 = vunpack.c.l.b16 %v278
      %v646 = vunpack.c.l.b16 %v292
      %v647 = vunpack.c.l.b16 %v306
      %v648 = vpack.c.b16 %v641, %v640
      %v649 = vpack.c.b16 %v643, %v642
      %v650 = vpack.c.b16 %v645, %v644
      %v651 = vpack.c.b16 %v647, %v646
      %652 = vrot.lane.b32.xlu0 %v648, 8
      %v653 = vpop.permute.xlu0 %652
      %654 = vrot.lane.b32.xlu0 %v649, 8
      %v655 = vpop.permute.xlu0 %654
      %656 = vrot.lane.b32.xlu0 %v650, 8
      %v657 = vpop.permute.xlu0 %656
      %658 = vrot.lane.b32.xlu0 %v651, 8
      %v659 = vpop.permute.xlu0 %658
      %v668 = vunpack.c.l.b16 %v310
      %v669 = vunpack.c.l.b16 %v311
      %v670 = vunpack.c.l.b16 %v312
      %v671 = vunpack.c.l.b16 %v313
      %v672 = vunpack.c.l.b16 %v314
      %v673 = vunpack.c.l.b16 %v315
      %v674 = vunpack.c.l.b16 %v316
      %v675 = vunpack.c.l.b16 %v317
      %v676 = vpack.c.b16 %v669, %v668
      %v677 = vpack.c.b16 %v671, %v670
      %v678 = vpack.c.b16 %v673, %v672
      %v679 = vpack.c.b16 %v675, %v674
      %680 = vrot.lane.b32.xlu0 %v676, 12
      %v681 = vpop.permute.xlu0 %680
      %682 = vrot.lane.b32.xlu0 %v677, 12
      %v683 = vpop.permute.xlu0 %682
      %684 = vrot.lane.b32.xlu0 %v678, 12
      %v685 = vpop.permute.xlu0 %684
      %686 = vrot.lane.b32.xlu0 %v679, 12
      %v687 = vpop.permute.xlu0 %686
      %v696 = vunpack.c.l.b16 %v321
      %v697 = vunpack.c.l.b16 %v322
      %v698 = vunpack.c.l.b16 %v323
      %v699 = vunpack.c.l.b16 %v324
      %v700 = vunpack.c.l.b16 %v325
      %v701 = vunpack.c.l.b16 %v326
      %v702 = vunpack.c.l.b16 %v327
      %v703 = vunpack.c.l.b16 %v328
      %v704 = vpack.c.b16 %v697, %v696
      %v705 = vpack.c.b16 %v699, %v698
      %v706 = vpack.c.b16 %v701, %v700
      %v707 = vpack.c.b16 %v703, %v702
      %708 = vrot.lane.b32.xlu0 %v704, 16
      %v709 = vpop.permute.xlu0 %708
      %710 = vrot.lane.b32.xlu0 %v705, 16
      %v711 = vpop.permute.xlu0 %710
      %712 = vrot.lane.b32.xlu0 %v706, 16
      %v713 = vpop.permute.xlu0 %712
      %714 = vrot.lane.b32.xlu0 %v707, 16
      %v715 = vpop.permute.xlu0 %714
      %v716 = vunpack.c.l.b16 %v350
      %v717 = vunpack.c.l.b16 %v364
      %v718 = vunpack.c.l.b16 %v378
      %v719 = vunpack.c.l.b16 %v392
      %v720 = vunpack.c.l.b16 %v406
      %v721 = vunpack.c.l.b16 %v420
      %v722 = vunpack.c.l.b16 %v434
      %v723 = vunpack.c.l.b16 %v448
      %v724 = vpack.c.b16 %v717, %v716
      %v725 = vpack.c.b16 %v719, %v718
      %v726 = vpack.c.b16 %v721, %v720
      %v727 = vpack.c.b16 %v723, %v722
      %728 = vrot.lane.b32.xlu0 %v724, 20
      %v729 = vpop.permute.xlu0 %728
      %730 = vrot.lane.b32.xlu0 %v725, 20
      %v731 = vpop.permute.xlu0 %730
      %732 = vrot.lane.b32.xlu0 %v726, 20
      %v733 = vpop.permute.xlu0 %732
      %734 = vrot.lane.b32.xlu0 %v727, 20
      %v735 = vpop.permute.xlu0 %734
      %v744 = vunpack.c.l.b16 %v453
      %v745 = vunpack.c.l.b16 %v454
      %v746 = vunpack.c.l.b16 %v455
      %v747 = vunpack.c.l.b16 %v456
      %v748 = vunpack.c.l.b16 %v457
      %v749 = vunpack.c.l.b16 %v458
      %v750 = vunpack.c.l.b16 %v459
      %v751 = vunpack.c.l.b16 %v460
      %v752 = vpack.c.b16 %v745, %v744
      %v753 = vpack.c.b16 %v747, %v746
      %v754 = vpack.c.b16 %v749, %v748
      %v755 = vpack.c.b16 %v751, %v750
      %756 = vrot.lane.b32.xlu0 %v752, 24
      %v757 = vpop.permute.xlu0 %756
      %758 = vrot.lane.b32.xlu0 %v753, 24
      %v759 = vpop.permute.xlu0 %758
      %760 = vrot.lane.b32.xlu0 %v754, 24
      %v761 = vpop.permute.xlu0 %760
      %762 = vrot.lane.b32.xlu0 %v755, 24
      %v763 = vpop.permute.xlu0 %762
      %v772 = vunpack.c.l.b16 %v464
      %v773 = vunpack.c.l.b16 %v465
      %v774 = vunpack.c.l.b16 %v466
      %v775 = vunpack.c.l.b16 %v467
      %v776 = vunpack.c.l.b16 %v468
      %v777 = vunpack.c.l.b16 %v469
      %v778 = vunpack.c.l.b16 %v470
      %v779 = vunpack.c.l.b16 %v471
      %v780 = vpack.c.b16 %v773, %v772
      %v781 = vpack.c.b16 %v775, %v774
      %v782 = vpack.c.b16 %v777, %v776
      %v783 = vpack.c.b16 %v779, %v778
      %784 = vrot.lane.b32.xlu0 %v780, 28
      %v785 = vpop.permute.xlu0 %784
      %786 = vrot.lane.b32.xlu0 %v781, 28
      %v787 = vpop.permute.xlu0 %786
      %788 = vrot.lane.b32.xlu0 %v782, 28
      %v789 = vpop.permute.xlu0 %788
      %790 = vrot.lane.b32.xlu0 %v783, 28
      %v791 = vpop.permute.xlu0 %790
      %v792 = vunpack.c.l.b16 %v493
      %v793 = vunpack.c.l.b16 %v507
      %v794 = vunpack.c.l.b16 %v521
      %v795 = vunpack.c.l.b16 %v535
      %v796 = vunpack.c.l.b16 %v549
      %v797 = vunpack.c.l.b16 %v563
      %v798 = vunpack.c.l.b16 %v577
      %v799 = vunpack.c.l.b16 %v591
      %v800 = vpack.c.b16 %v793, %v792
      %v801 = vpack.c.b16 %v795, %v794
      %v802 = vpack.c.b16 %v797, %v796
      %v803 = vpack.c.b16 %v799, %v798
      %804 = vrot.lane.b32.xlu0 %v800, 32
      %v805 = vpop.permute.xlu0 %804
      %806 = vrot.lane.b32.xlu0 %v801, 32
      %v807 = vpop.permute.xlu0 %806
      %808 = vrot.lane.b32.xlu0 %v802, 32
      %v809 = vpop.permute.xlu0 %808
      %810 = vrot.lane.b32.xlu0 %v803, 32
      %v811 = vpop.permute.xlu0 %810
      %vm812 = vcmask 31744
      %v815 = vsel %vm812, %v608, %v633
      %v818 = vsel %vm812, %v609, %v635
      %v821 = vsel %vm812, %v610, %v637
      %v824 = vsel %vm812, %v611, %v639
      %vm825 = vcmask 64512
      %v827 = vsel %vm825, %v815, %v653
      %v829 = vsel %vm825, %v818, %v655
      %v831 = vsel %vm825, %v821, %v657
      %v833 = vsel %vm825, %v824, %v659
      %vm834 = vcmask 97280
      %v836 = vsel %vm834, %v827, %v681
      %v838 = vsel %vm834, %v829, %v683
      %v840 = vsel %vm834, %v831, %v685
      %v842 = vsel %vm834, %v833, %v687
      %vm843 = vcmask 130048
      %v845 = vsel %vm843, %v836, %v709
      %v847 = vsel %vm843, %v838, %v711
      %v849 = vsel %vm843, %v840, %v713
      %v851 = vsel %vm843, %v842, %v715
      %vm852 = vcmask 162816
      %v854 = vsel %vm852, %v845, %v729
      %v856 = vsel %vm852, %v847, %v731
      %v858 = vsel %vm852, %v849, %v733
      %v860 = vsel %vm852, %v851, %v735
      %vm861 = vcmask 195584
      %v863 = vsel %vm861, %v854, %v757
      %v865 = vsel %vm861, %v856, %v759
      %v867 = vsel %vm861, %v858, %v761
      %v869 = vsel %vm861, %v860, %v763
      %vm870 = vcmask 228352
      %v872 = vsel %vm870, %v863, %v785
      %v874 = vsel %vm870, %v865, %v787
      %v876 = vsel %vm870, %v867, %v789
      %v878 = vsel %vm870, %v869, %v791
      %vm879 = vcmask 261120
      %v881 = vsel %vm879, %v872, %v805
      %v883 = vsel %vm879, %v874, %v807
      %v885 = vsel %vm879, %v876, %v809
      %v887 = vsel %vm879, %v878, %v811
      %v888 = vld [vmem:[%s1] sm:$0xf]
      %vm889 = vcmask 293888
      %v891 = vsel %vm889, %v888, 0
      %v893 = vsel %vm889, %v881, 0
      %v895 = vsel %vm889, %v883, 0
      %v897 = vsel %vm889, %v885, 0
      %v899 = vsel %vm889, %v887, 0
      %901 = vmatprep.subr.bf16.mxu0 0
      %902 = vmatpush1.bf16.xpose.msra.mxu0 %v893
      %903 = vmatprep.subr.bf16.mxu0 0
      %904 = vmatpush1.bf16.xpose.msra.mxu0 %v895
      %905 = vmatprep.subr.bf16.mxu0 0
      %906 = vmatpush1.bf16.xpose.msra.mxu0 %v897
      %907 = vmatprep.subr.bf16.mxu0 0
      %908 = vmatpush1.bf16.xpose.msra.mxu0 %v899
      %909 = vmatprep.subr.bf16.mxu0 0
      %910 = vmatpush1.bf16.xpose.msra.mxu0 0
      %911 = vmatprep.subr.bf16.mxu0 0
      %912 = vmatpush1.bf16.xpose.msra.mxu0 0
      %913 = vmatprep.subr.bf16.mxu0 0
      %914 = vmatpush1.bf16.xpose.msra.mxu0 0
      %915 = vmatprep.subr.bf16.mxu0 0
      %916 = vmatpush1.bf16.xpose.msra.mxu0 0
      %917 = vmatprep.subr.bf16.mxu0 0
      %918 = vmatpush1.bf16.xpose.msra.mxu0 0
      %919 = vmatprep.subr.bf16.mxu0 0
      %920 = vmatpush1.bf16.xpose.msra.mxu0 0
      %921 = vmatprep.subr.bf16.mxu0 0
      %922 = vmatpush1.bf16.xpose.msra.mxu0 0
      %923 = vmatprep.subr.bf16.mxu0 0
      %924 = vmatpush1.bf16.xpose.msra.mxu0 0
      %925 = vmatprep.subr.bf16.mxu0 0
      %926 = vmatpush1.bf16.xpose.msra.mxu0 0
      %927 = vmatprep.subr.bf16.mxu0 0
      %928 = vmatpush1.bf16.xpose.msra.mxu0 0
      %929 = vmatprep.subr.bf16.mxu0 0
      %930 = vmatpush1.bf16.xpose.msra.mxu0 0
      %931 = vmatprep.subr.bf16.mxu0 0
      %932 = vmatpush1.bf16.xpose.msra.mxu0 0
      %933 = vmatprep.mubr.bf16.mxu0 0
      %934 = vmatmul.mubr.bf16.gmra.mrb[0].mxu0 %v891
      %v935 = vpop.f32.mrb[0].mxu0
      %v936 = vadd.f32 0.0, %v935
      %v937 = vpop.f32.mrb[0].mxu0
      %v938 = vpop.f32.mrb[0].mxu0
      %v939 = vpop.f32.mrb[0].mxu0
      %940 = vdwg.mxu0
      %v941 = vld [vmem:[#allocation2] sm:$0xff]
      %vm942 = vcmask 523264
      %v943 = vsel %vm942, %v936, 0.0
      %944 = vadd.xlane.f32.xlu0 %v943
      %v945 = vpop.xlane.xlu0 %944
      %v946 = vadd.f32 %v941, %v945
      %vm947 = vcmask 7168
      %948 = vst.msk [vmem:[#allocation2] sm:$0xff] %vm947, %v946
      %949 = vst.msk [vmem:[%s153] sm:$0xff] %vm942, %v936
      // Predicated region
      $region33: #{g_downsampling_block.1} parent=27 // pred_check
        %p950 = pneg %p155
      $region34: #{g_downsampling_block.1} parent=27 // pred_check_branch
        %952 = sbr.rel (%p950) target = $region36
      $region35: #{g_downsampling_block.1} parent=27 // pred_region
        %v953 = vld [vmem:[#allocation2] sm:$0xff]
        %v954 = vmul.f32 %v953, 0.015625
        %v955 = vld [vmem:[%s153] sm:$0xff]
        %957 = vset.pattern.permute.xlu0 0
        %958 = vperm.xlu0 %957, %v954
        %v959 = vpop.permute.xlu0 %958
        %v961 = vsub.f32 %v955, %v959
        %v962 = vmul.f32 %v961, %v961
        %v963 = vsel %vm942, %v962, 0.0
        %964 = vadd.xlane.f32.xlu0 %v963
        %v965 = vpop.xlane.xlu0 %964
        %v966 = vmul.f32 %v965, 0.015625
        %v967 = vadd.f32 %v966, 1e-05
        %v968 = vrsqrt.pop %v967
        %v969 = vmul.f32 %v961, %v968
        %v970 = vmax.f32 %v969, 0.0
        %971 = vst.msk [vmem:[%s153] sm:$0xff] %vm942, %v970
      $region36: #{g_downsampling_block.1} parent=27 // pred_fallthru
        _
      %p972 = scmp.lt.s32.totalorder %s17, 1
      %s973 = scalar_select %p972, %s17, 1
      %s974 = smul.addr %s973, 8
      %s975 = scalar_lea.vmem %s2, %s974
      // Predicated region
      $region37: #{g_downsampling_block.1} parent=27 // pred_check
        %p976 = pneg %p90
      $region38: #{g_downsampling_block.1} parent=27 // pred_check_branch
        %978 = sbr.rel (%p976) target = $region40
      $region39: #{g_downsampling_block.1} parent=27 // pred_region
        _
      $region40: #{g_downsampling_block.1} parent=27 // pred_fallthru
        _
    $region28: #{g_downsampling_block.1} parent=5 // pred_fallthru
      _
    %p979 = scmp.le.s32.totalorder 2, %s8
    // Predicated region
    $region41: #{g_downsampling_block.1} parent=5 // pred_check
      %p980 = pneg %p979
    $region42: #{g_downsampling_block.1} parent=5 // pred_check_branch
      %982 = sbr.rel (%p980) target = $region44
    $region43: #{g_downsampling_block.1} parent=5 // pred_region
      %s983 = ssub.s32 %s8, 2
      // Predicated region
      $region45: #{g_downsampling_block.1} parent=43 // pred_check
        %p984 = pneg %p96
      $region46: #{g_downsampling_block.1} parent=43 // pred_check_branch
        %986 = sbr.rel (%p984) target = $region48
      $region47: #{g_downsampling_block.1} parent=43 // pred_region
        %p987 = scmp.lt.s32.totalorder %s19, 1
        %s988 = scalar_select %p987, %s19, 1
        %s989 = smul.addr %s988, 8
        %s990 = scalar_lea.vmem %s2, %s989
      $region48: #{g_downsampling_block.1} parent=43 // pred_fallthru
        _
    $region44: #{g_downsampling_block.1} parent=5 // pred_fallthru
      _
  $region6: #{g_downsampling_block.1} parent=0 // loop_footer
    %s12 = sadd.s32 1, %s8
  $region7: #{g_downsampling_block.1} parent=0 // loop_footer_branch
    %7 = sbr.rel target = $region3
  $region8: #{g_downsampling_block.1} parent=0 // loop_exit
    _

</llo_original>
